<compile_context>
chip_gen: v7x
topology: tpu7x:2x2x1
jax: 0.10.0
libtpu: 0.0.40
codegen_flags: <defaults>
</compile_context>

<pallas_src>
import jax
import jax.numpy as jnp
from jax.experimental import pallas as pl
from jax.experimental.pallas import tpu as pltpu


def _make_upsample2x_kernel(F, W):
    """Kernel over fat rows: x_ref (rows, F*W) -> o_ref (rows, 4*F*W)."""

    def kernel(x_ref, o_ref):
        rows = x_ref.shape[0]
        for f in range(F):  # static unroll over folded sub-rows
            xf = x_ref[:, f * W:(f + 1) * W]                     # (rows, W)
            # Width doubling: out[:, 2j] = out[:, 2j+1] = xf[:, j]
            # (broadcast-then-reshape formulation; see perf review note).
            xw = jnp.broadcast_to(xf[:, :, None], (rows, W, 2)).reshape(rows, 2 * W)
            base = f * 4 * W
            # The two duplicated output rows are adjacent in the folded layout;
            # store each half directly (static ref slices are free, no concat temp).
            o_ref[:, base:base + 2 * W] = xw
            o_ref[:, base + 2 * W:base + 4 * W] = xw

    return kernel


def upsample_nearest_2x(x):
    """Nearest-neighbor 2x spatial upsample of an NCHW tensor via a Pallas kernel."""
    N, C, H, W = x.shape
    dtype = x.dtype
    itemsize = jnp.dtype(dtype).itemsize

    lane = 128
    sub = 8  # (8, 128) block-divisibility constraint on the second-to-last dim

    def rup(a, b):
        return ((a + b - 1) // b) * b

    # ---- fold factor F: smallest divisor of H with 4*F*W >= 128 -------------
    f_target = max(1, pl.cdiv(lane, 4 * W))
    F = H
    for f in range(f_target, H + 1):
        if H % f == 0:
            F = f
            break

    Rf = (N * C * H) // F          # number of fat rows
    fat_w = F * W                  # fat input row width
    out_w = 4 * F * W              # fat output row width (lane-dense for W*H>=32)

    x_rows = x.reshape(Rf, fat_w)  # free reshape (contiguous)

    # ---- block sizing: explicit VMEM budget incl. in-kernel temporaries -----
    row_vmem = itemsize * (
        2 * rup(fat_w, lane)       # input pipeline block, double-buffered
        + 2 * rup(out_w, lane)     # output pipeline block, double-buffered
        + rup(W, lane)             # xf slice temporary
        + 2 * rup(2 * W, lane)     # xw temporary (+ possible reshape materialization)
    )
    vmem_budget = 24 << 20         # keeps headroom under the 32 MiB scoped limit
    rows_budget = max(1, vmem_budget // row_vmem)

    # Deepen the grid: aim for >= 8 steps so input/output DMA overlap and both
    # v7x TensorCores get several blocks each (per-step overhead ~0.35 us).
    target_steps = 8
    rows_blk = min(rows_budget, max(sub, pl.cdiv(Rf, target_steps)))
    if rows_blk >= Rf:
        rows_blk = Rf              # full extent is always a legal block size
    else:
        rows_blk = max(sub, (rows_blk // sub) * sub)  # multiple of 8
    grid = (pl.cdiv(Rf, rows_blk),)

    bytes_accessed = 5 * N * C * H * W * itemsize  # read 1x, write 4x

    out_rows = pl.pallas_call(
        _make_upsample2x_kernel(F, W),
        out_shape=jax.ShapeDtypeStruct((Rf, out_w), dtype),
        grid_spec=pl.GridSpec(
            grid=grid,
            in_specs=[pl.BlockSpec((rows_blk, fat_w), lambda i: (i, 0))],
            out_specs=pl.BlockSpec((rows_blk, out_w), lambda i: (i, 0)),
        ),
        compiler_params=pltpu.CompilerParams(
            # "parallel" lets the runtime shard the 1-D grid across v7x's 2 TCs.
            dimension_semantics=("parallel",),
            vmem_limit_bytes=32 << 20,  # above v5e's 16 MiB default, under v7x's 64 MiB
        ),
        cost_estimate=pl.CostEstimate(
            flops=0, transcendentals=0, bytes_accessed=bytes_accessed),
    )(x_rows)

    return out_rows.reshape(N, C, 2 * H, 2 * W)  # free reshape (contiguous)


if __name__ == "__main__":
    key = jax.random.PRNGKey(0)
    N, C, H, W = 2, 4, 16, 16
    x = jax.random.normal(key, (N, C, H, W), dtype=jnp.float32)

    out = jax.block_until_ready(upsample_nearest_2x(x))

    # Reference: nearest-neighbor 2x upsample (matches torch interpolate mode='nearest').
    ref = jnp.repeat(jnp.repeat(x, 2, axis=2), 2, axis=3)

    assert out.shape == (N, C, 2 * H, 2 * W), out.shape
    assert out.dtype == x.dtype, out.dtype
    assert jnp.array_equal(out, ref), "mismatch vs reference nearest upsample"

    print("KERNEL_OK")
</pallas_src>

<mosaic_0001>
module attributes {stable_mosaic.version = 11 : i64} {
  func.func @kernel(%arg0: i32, %arg1: memref<8x32xf32, #tpu.memory_space<vmem>>, %arg2: memref<8x128xf32, #tpu.memory_space<vmem>>) attributes {dimension_semantics = [#tpu.dimension_semantics<parallel>], iteration_bounds = array<i64: 8>, scalar_prefetch = 0 : i64, scratch_operands = 0 : i64, tpu.core_type = #tpu.core_type<tc>, window_params = [{transform_indices = @transform_0, window_bounds = array<i64: 8, 32>}, {transform_indices = @transform_1, window_bounds = array<i64: 8, 128>}]} {
    %c0 = arith.constant 0 : index
    %c0_0 = arith.constant 0 : index
    %0 = vector.load %arg1[%c0, %c0_0] : memref<8x32xf32, #tpu.memory_space<vmem>>, vector<8x16xf32>
    %1 = vector.shape_cast %0 : vector<8x16xf32> to vector<8x16x1xf32>
    %2 = vector.shape_cast %1 : vector<8x16x1xf32> to vector<8x16x1xf32>
    %3 = vector.broadcast %2 : vector<8x16x1xf32> to vector<8x16x2xf32>
    %4 = vector.shape_cast %3 : vector<8x16x2xf32> to vector<8x32xf32>
    %c0_1 = arith.constant 0 : index
    %c0_2 = arith.constant 0 : index
    %5 = vector.load %arg2[%c0_1, %c0_2] : memref<8x128xf32, #tpu.memory_space<vmem>>, vector<8x32xf32>
    tpu.vector_store %arg2[%c0_1, %c0_2], %4 {strides = array<i32>} : memref<8x128xf32, #tpu.memory_space<vmem>>, vector<8x32xf32>,
    %c0_3 = arith.constant 0 : index
    %c32 = arith.constant 32 : index
    %6 = vector.load %arg2[%c0_3, %c32] : memref<8x128xf32, #tpu.memory_space<vmem>>, vector<8x32xf32>
    tpu.vector_store %arg2[%c0_3, %c32], %4 {strides = array<i32>} : memref<8x128xf32, #tpu.memory_space<vmem>>, vector<8x32xf32>,
    %c0_4 = arith.constant 0 : index
    %c16 = arith.constant 16 : index
    %7 = vector.load %arg1[%c0_4, %c16] : memref<8x32xf32, #tpu.memory_space<vmem>>, vector<8x16xf32>
    %8 = vector.shape_cast %7 : vector<8x16xf32> to vector<8x16x1xf32>
    %9 = vector.shape_cast %8 : vector<8x16x1xf32> to vector<8x16x1xf32>
    %10 = vector.broadcast %9 : vector<8x16x1xf32> to vector<8x16x2xf32>
    %11 = vector.shape_cast %10 : vector<8x16x2xf32> to vector<8x32xf32>
    %c0_5 = arith.constant 0 : index
    %c64 = arith.constant 64 : index
    %12 = vector.load %arg2[%c0_5, %c64] : memref<8x128xf32, #tpu.memory_space<vmem>>, vector<8x32xf32>
    tpu.vector_store %arg2[%c0_5, %c64], %11 {strides = array<i32>} : memref<8x128xf32, #tpu.memory_space<vmem>>, vector<8x32xf32>,
    %c0_6 = arith.constant 0 : index
    %c96 = arith.constant 96 : index
    %13 = vector.load %arg2[%c0_6, %c96] : memref<8x128xf32, #tpu.memory_space<vmem>>, vector<8x32xf32>
    tpu.vector_store %arg2[%c0_6, %c96], %11 {strides = array<i32>} : memref<8x128xf32, #tpu.memory_space<vmem>>, vector<8x32xf32>,
    return
  }
  func.func @transform_0(%arg0: i32) -> (i32, i32) {
    %c0_i32 = arith.constant 0 : i32
    %c0_i32_0 = arith.constant 0 : i32
    return %arg0, %c0_i32 : i32, i32
  }
  func.func @transform_1(%arg0: i32) -> (i32, i32) {
    %c0_i32 = arith.constant 0 : i32
    %c0_i32_0 = arith.constant 0 : i32
    return %arg0, %c0_i32 : i32, i32
  }
}

</mosaic_0001>

<llo_original>
// kernel: tpu_custom_call.1
$region0: #{tpu_custom_call.1}
  #allocation0 [shape = 'u32[]', space=smem, size = 0x4, offset = 0x4, fixed_abs, tag = 'smem constant byte address 0x4 - core index']
  #allocation1 [shape = 'u32[144,128]{1,0:T(1,128)}', space=vmem, size = 0x12000, scoped, tag = 'internal scratch']
  %s0 = inlined_call_operand.vmem [shape: f32[64,32], index: 0, kind: input, shape index: {}]
  %s1 = inlined_call_operand.hbm [shape: f32[64,128], index: 1, kind: output, shape index: {}]
  %s2 = sld [smem:[#allocation0]]
  $region37: #{tpu_custom_call.1} parent=0
    _
  %s4 = ssub.s32 1, %s2
  %s5 = scalar_select 0, %s4, %s2
  $region1: #{tpu_custom_call.1} parent=0
    #allocation2 [shape = 'u8[8192]{0}', space=vmem, size = 0x2000, scoped, tag = 'output window, operand 0']
    #allocation3 [shape = 's32[2]{0}', space=sflag, size = 0x8, scoped, tag = 'scoped memory for tpu_custom_call.1']
    %6 = vsyncpa [#allocation3], 0
    %s7 = scalar_lea.sflag [#allocation3], 1
    %8 = vsyncpa %s7, 0
    loop: start=0, step=1, limit=10
    $region2: #{tpu_custom_call.1} parent=1 // loop_pre_header
      _
    $region3: #{tpu_custom_call.1} parent=1 // loop_header
      %s10 = sphi 0, %s14
      %p11 = scmp.ge.s32.totalorder %s10, 10
      %s20 = sphi 0, %s22
      %s23 = sphi 0, %s20
      %s24 = sphi 0, %s23
      %s40 = sphi 0, %s24
      %s46 = sphi 0, %s48
      %s49 = sphi 0, %s46
      %s50 = sphi 0, %s49
      %s66 = sphi 0, %s50
    $region4: #{tpu_custom_call.1} parent=1 // loop_header_branch
      %13 = sbr.rel (%p11) target = $region8
    $region5: #{tpu_custom_call.1} parent=1 // loop_body
      %s15 = ssub.s32 %s10, 1
      %s16 = ssub.s32 %s10, 2
      %s17 = sadd.s32 %s10, 1
      %s18 = ssub.s32 %s10, %s17
      %p19 = scmp.eq.s32.totalorder %s18, 0
      %s21 = sadd.s32 %s20, 1
      %s22 = scalar_select %p19, %s20, %s21
      %p25 = pneg %p19
      %p26 = scmp.eq.s32.totalorder %s10, 7
      %p27 = por %p25, %p26
      %p28 = scmp.ne.s32.totalorder %s20, %s23
      %p29 = scmp.eq.s32.totalorder %s10, 0
      %p30 = por %p28, %p29
      %p31 = scmp.ne.s32.totalorder %s20, %s23
      %p32 = scmp.eq.s32.totalorder %s15, 7
      %p33 = por %p31, %p32
      %p34 = scmp.ne.s32.totalorder %s23, %s24
      %p35 = scmp.eq.s32.totalorder %s15, 0
      %p36 = por %p34, %p35
      %p37 = scmp.ne.s32.totalorder %s23, %s24
      %p38 = scmp.eq.s32.totalorder %s16, 7
      %p39 = por %p37, %p38
      %p41 = scmp.ne.s32.totalorder %s24, %s40
      %p42 = scmp.eq.s32.totalorder %s16, 0
      %p43 = por %p41, %p42
      %s44 = ssub.s32 %s10, %s17
      %p45 = scmp.eq.s32.totalorder %s44, 0
      %s47 = sadd.s32 %s46, 1
      %s48 = scalar_select %p45, %s46, %s47
      %p51 = pneg %p45
      %p52 = scmp.eq.s32.totalorder %s10, 7
      %p53 = por %p51, %p52
      %p54 = scmp.ne.s32.totalorder %s46, %s49
      %p55 = scmp.eq.s32.totalorder %s10, 0
      %p56 = por %p54, %p55
      %p57 = scmp.ne.s32.totalorder %s46, %s49
      %p58 = scmp.eq.s32.totalorder %s15, 7
      %p59 = por %p57, %p58
      %p60 = scmp.ne.s32.totalorder %s49, %s50
      %p61 = scmp.eq.s32.totalorder %s15, 0
      %p62 = por %p60, %p61
      %p63 = scmp.ne.s32.totalorder %s49, %s50
      %p64 = scmp.eq.s32.totalorder %s16, 7
      %p65 = por %p63, %p64
      %p67 = scmp.ne.s32.totalorder %s50, %s66
      %p68 = scmp.eq.s32.totalorder %s16, 0
      %p69 = por %p67, %p68
      %p70 = scmp.le.s32.totalorder 1, %s10
      %p71 = scmp.lt.s32.totalorder %s10, 9
      %p72 = pnand %p70, %p71
      %p73 = pneg %p72
      // Predicated region
      $region9: #{tpu_custom_call.1} parent=5 // pred_check
        _
      $region10: #{tpu_custom_call.1} parent=5 // pred_check_branch
        %75 = sbr.rel (%p72) target = $region12
      $region11: #{tpu_custom_call.1} parent=5 // pred_region
        %s76 = ssub.s32 %s10, 1
      $region12: #{tpu_custom_call.1} parent=5 // pred_fallthru
        _
      %p77 = scmp.lt.s32.totalorder %s10, 8
      // Predicated region
      $region13: #{tpu_custom_call.1} parent=5 // pred_check
        %p78 = pneg %p77
      $region14: #{tpu_custom_call.1} parent=5 // pred_check_branch
        %80 = sbr.rel (%p78) target = $region16
      $region15: #{tpu_custom_call.1} parent=5 // pred_region
        // Predicated region
        $region17: #{tpu_custom_call.1} parent=15 // pred_check
          %p81 = pneg %p30
        $region18: #{tpu_custom_call.1} parent=15 // pred_check_branch
          %83 = sbr.rel (%p81) target = $region20
        $region19: #{tpu_custom_call.1} parent=15 // pred_region
          %p84 = scmp.lt.s32.totalorder %s10, 7
          %s85 = scalar_select %p84, %s10, 7
          %s86 = smul.addr %s85, 8
          %s87 = scalar_lea.vmem %s0, %s86
        $region20: #{tpu_custom_call.1} parent=15 // pred_fallthru
          _
      $region16: #{tpu_custom_call.1} parent=5 // pred_fallthru
        _
      %p88 = scmp.le.s32.totalorder 1, %s10
      %p89 = scmp.lt.s32.totalorder %s10, 9
      %p90 = pnand %p88, %p89
      %p91 = pneg %p90
      // Predicated region
      $region21: #{tpu_custom_call.1} parent=5 // pred_check
        _
      $region22: #{tpu_custom_call.1} parent=5 // pred_check_branch
        %93 = sbr.rel (%p90) target = $region24
      $region23: #{tpu_custom_call.1} parent=5 // pred_region
        %s94 = ssub.s32 %s10, 1
        %p95 = scmp.lt.s32.totalorder %s15, 7
        %s96 = scalar_select %p95, %s15, 7
        %s97 = smul.addr %s96, 8
        %s98 = scalar_lea.vmem %s0, %s97
        %p99 = pneg %p36
        %p100 = pneg %p33
        %p101 = pneg %p62
        %p102 = pneg %p59
        %s103 = sand.u32 %s49, 1
        %s104 = scalar_lea.sflag [#allocation3], %s103
        %s105 = sand.u32 %s49, 1
        %s106 = smul.addr %s105, 8
        %s107 = scalar_lea.vmem [#allocation2], %s106
        %p108 = scmp.lt.s32.totalorder %s15, 7
        %s109 = scalar_select %p108, %s15, 7
        %s110 = smul.addr %s109, 8
        %s111 = scalar_lea.vmem %s0, %s110
        %v112 = vld [vmem:[%s111] sm:$0xff]
        %v113 = vlaneseq
        %v114 = vshrl.u32 %v113, 7
        %v115 = vsub.s32 0, %v114
        %v116 = vrot.slane %v112, %v115
        %118 = vbcast.lane.b32.xlu0 %v116, 256
        %v119 = vpop.permute.xlu0 %118
        %s121 = sor.u32 256, 8
        %122 = vbcast.lane.b32.xlu0 %v116, %s121
        %v123 = vpop.permute.xlu0 %122
        %v124 = vlaneseq
        %v125 = vshrl.u32 %v124, 7
        %v126 = vsub.s32 1, %v125
        %v127 = vrot.slane %v112, %v126
        %129 = vbcast.lane.b32.xlu0 %v127, 256
        %v130 = vpop.permute.xlu0 %129
        %s132 = sor.u32 256, 8
        %133 = vbcast.lane.b32.xlu0 %v127, %s132
        %v134 = vpop.permute.xlu0 %133
        %v135 = vlaneseq
        %v136 = vshrl.u32 %v135, 7
        %v137 = vsub.s32 2, %v136
        %v138 = vrot.slane %v112, %v137
        %140 = vbcast.lane.b32.xlu0 %v138, 256
        %v141 = vpop.permute.xlu0 %140
        %s143 = sor.u32 256, 8
        %144 = vbcast.lane.b32.xlu0 %v138, %s143
        %v145 = vpop.permute.xlu0 %144
        %v146 = vlaneseq
        %v147 = vshrl.u32 %v146, 7
        %v148 = vsub.s32 3, %v147
        %v149 = vrot.slane %v112, %v148
        %151 = vbcast.lane.b32.xlu0 %v149, 256
        %v152 = vpop.permute.xlu0 %151
        %s154 = sor.u32 256, 8
        %155 = vbcast.lane.b32.xlu0 %v149, %s154
        %v156 = vpop.permute.xlu0 %155
        %v157 = vlaneseq
        %v158 = vshrl.u32 %v157, 7
        %v159 = vsub.s32 4, %v158
        %v160 = vrot.slane %v112, %v159
        %162 = vbcast.lane.b32.xlu0 %v160, 256
        %v163 = vpop.permute.xlu0 %162
        %s165 = sor.u32 256, 8
        %166 = vbcast.lane.b32.xlu0 %v160, %s165
        %v167 = vpop.permute.xlu0 %166
        %v168 = vlaneseq
        %v169 = vshrl.u32 %v168, 7
        %v170 = vsub.s32 5, %v169
        %v171 = vrot.slane %v112, %v170
        %173 = vbcast.lane.b32.xlu0 %v171, 256
        %v174 = vpop.permute.xlu0 %173
        %s176 = sor.u32 256, 8
        %177 = vbcast.lane.b32.xlu0 %v171, %s176
        %v178 = vpop.permute.xlu0 %177
        %v179 = vlaneseq
        %v180 = vshrl.u32 %v179, 7
        %v181 = vsub.s32 6, %v180
        %v182 = vrot.slane %v112, %v181
        %184 = vbcast.lane.b32.xlu0 %v182, 256
        %v185 = vpop.permute.xlu0 %184
        %s187 = sor.u32 256, 8
        %188 = vbcast.lane.b32.xlu0 %v182, %s187
        %v189 = vpop.permute.xlu0 %188
        %v190 = vlaneseq
        %v191 = vshrl.u32 %v190, 7
        %v192 = vsub.s32 7, %v191
        %v193 = vrot.slane %v112, %v192
        %195 = vbcast.lane.b32.xlu0 %v193, 256
        %v196 = vpop.permute.xlu0 %195
        %s198 = sor.u32 256, 8
        %199 = vbcast.lane.b32.xlu0 %v193, %s198
        %v200 = vpop.permute.xlu0 %199
        %v201 = vcombine.low %v119, %v141
        %v202 = vcombine.high %v119, %v141
        %v204 = vunpack.c.l.s4 1983009808
        %v205 = vunpack.c.0.s8 %v204
        %v206 = vlaneseq
        %v207 = vshrl.u32 %v206, 7
        %v208 = vsub.s32 %v205, %v207
        %v209 = vrot.slane %v201, %v208
        %v211 = vunpack.c.l.s4 1983009808
        %v212 = vunpack.c.0.s8 %v211
        %v213 = vlaneseq
        %v214 = vshrl.u32 %v213, 7
        %v215 = vsub.s32 %v212, %v214
        %v216 = vrot.slane %v202, %v215
        %v217 = vcombine.low %v130, %v152
        %v218 = vcombine.high %v130, %v152
        %v220 = vunpack.c.l.s4 1983009808
        %v221 = vunpack.c.0.s8 %v220
        %v222 = vlaneseq
        %v223 = vshrl.u32 %v222, 7
        %v224 = vsub.s32 %v221, %v223
        %v225 = vrot.slane %v217, %v224
        %v227 = vunpack.c.l.s4 1983009808
        %v228 = vunpack.c.0.s8 %v227
        %v229 = vlaneseq
        %v230 = vshrl.u32 %v229, 7
        %v231 = vsub.s32 %v228, %v230
        %v232 = vrot.slane %v218, %v231
        %v233 = vcombine.low %v163, %v185
        %v234 = vcombine.high %v163, %v185
        %v236 = vunpack.c.l.s4 1983009808
        %v237 = vunpack.c.0.s8 %v236
        %v238 = vlaneseq
        %v239 = vshrl.u32 %v238, 7
        %v240 = vsub.s32 %v237, %v239
        %v241 = vrot.slane %v233, %v240
        %v243 = vunpack.c.l.s4 1983009808
        %v244 = vunpack.c.0.s8 %v243
        %v245 = vlaneseq
        %v246 = vshrl.u32 %v245, 7
        %v247 = vsub.s32 %v244, %v246
        %v248 = vrot.slane %v234, %v247
        %v249 = vcombine.low %v174, %v196
        %v250 = vcombine.high %v174, %v196
        %v252 = vunpack.c.l.s4 1983009808
        %v253 = vunpack.c.0.s8 %v252
        %v254 = vlaneseq
        %v255 = vshrl.u32 %v254, 7
        %v256 = vsub.s32 %v253, %v255
        %v257 = vrot.slane %v249, %v256
        %v259 = vunpack.c.l.s4 1983009808
        %v260 = vunpack.c.0.s8 %v259
        %v261 = vlaneseq
        %v262 = vshrl.u32 %v261, 7
        %v263 = vsub.s32 %v260, %v262
        %v264 = vrot.slane %v250, %v263
        %v265 = vcombine.low %v209, %v225
        %v266 = vcombine.high %v209, %v225
        %v268 = vunpack.c.l.s4 1934713408
        %v269 = vunpack.c.0.s8 %v268
        %v270 = vlaneseq
        %v271 = vshrl.u32 %v270, 7
        %v272 = vsub.s32 %v269, %v271
        %v273 = vrot.slane %v265, %v272
        %v275 = vunpack.c.l.s4 1934713408
        %v276 = vunpack.c.0.s8 %v275
        %v277 = vlaneseq
        %v278 = vshrl.u32 %v277, 7
        %v279 = vsub.s32 %v276, %v278
        %v280 = vrot.slane %v266, %v279
        %v281 = vcombine.low %v216, %v232
        %v282 = vcombine.high %v216, %v232
        %v284 = vunpack.c.l.s4 1934713408
        %v285 = vunpack.c.0.s8 %v284
        %v286 = vlaneseq
        %v287 = vshrl.u32 %v286, 7
        %v288 = vsub.s32 %v285, %v287
        %v289 = vrot.slane %v281, %v288
        %v291 = vunpack.c.l.s4 1934713408
        %v292 = vunpack.c.0.s8 %v291
        %v293 = vlaneseq
        %v294 = vshrl.u32 %v293, 7
        %v295 = vsub.s32 %v292, %v294
        %v296 = vrot.slane %v282, %v295
        %v297 = vcombine.low %v241, %v257
        %v298 = vcombine.high %v241, %v257
        %v300 = vunpack.c.l.s4 1934713408
        %v301 = vunpack.c.0.s8 %v300
        %v302 = vlaneseq
        %v303 = vshrl.u32 %v302, 7
        %v304 = vsub.s32 %v301, %v303
        %v305 = vrot.slane %v297, %v304
        %v307 = vunpack.c.l.s4 1934713408
        %v308 = vunpack.c.0.s8 %v307
        %v309 = vlaneseq
        %v310 = vshrl.u32 %v309, 7
        %v311 = vsub.s32 %v308, %v310
        %v312 = vrot.slane %v298, %v311
        %v313 = vcombine.low %v248, %v264
        %v314 = vcombine.high %v248, %v264
        %v316 = vunpack.c.l.s4 1934713408
        %v317 = vunpack.c.0.s8 %v316
        %v318 = vlaneseq
        %v319 = vshrl.u32 %v318, 7
        %v320 = vsub.s32 %v317, %v319
        %v321 = vrot.slane %v313, %v320
        %v323 = vunpack.c.l.s4 1934713408
        %v324 = vunpack.c.0.s8 %v323
        %v325 = vlaneseq
        %v326 = vshrl.u32 %v325, 7
        %v327 = vsub.s32 %v324, %v326
        %v328 = vrot.slane %v314, %v327
        %v329 = vcombine.low %v273, %v305
        %v330 = vcombine.high %v273, %v305
        %v331 = vcombine.low %v280, %v312
        %v332 = vcombine.high %v280, %v312
        %v333 = vcombine.low %v289, %v321
        %v334 = vcombine.high %v289, %v321
        %v335 = vcombine.low %v296, %v328
        %v336 = vcombine.high %v296, %v328
        %v337 = vcombine.low %v123, %v145
        %v338 = vcombine.high %v123, %v145
        %v340 = vunpack.c.l.s4 1983009808
        %v341 = vunpack.c.0.s8 %v340
        %v342 = vlaneseq
        %v343 = vshrl.u32 %v342, 7
        %v344 = vsub.s32 %v341, %v343
        %v345 = vrot.slane %v337, %v344
        %v347 = vunpack.c.l.s4 1983009808
        %v348 = vunpack.c.0.s8 %v347
        %v349 = vlaneseq
        %v350 = vshrl.u32 %v349, 7
        %v351 = vsub.s32 %v348, %v350
        %v352 = vrot.slane %v338, %v351
        %v353 = vcombine.low %v134, %v156
        %v354 = vcombine.high %v134, %v156
        %v356 = vunpack.c.l.s4 1983009808
        %v357 = vunpack.c.0.s8 %v356
        %v358 = vlaneseq
        %v359 = vshrl.u32 %v358, 7
        %v360 = vsub.s32 %v357, %v359
        %v361 = vrot.slane %v353, %v360
        %v363 = vunpack.c.l.s4 1983009808
        %v364 = vunpack.c.0.s8 %v363
        %v365 = vlaneseq
        %v366 = vshrl.u32 %v365, 7
        %v367 = vsub.s32 %v364, %v366
        %v368 = vrot.slane %v354, %v367
        %v369 = vcombine.low %v167, %v189
        %v370 = vcombine.high %v167, %v189
        %v372 = vunpack.c.l.s4 1983009808
        %v373 = vunpack.c.0.s8 %v372
        %v374 = vlaneseq
        %v375 = vshrl.u32 %v374, 7
        %v376 = vsub.s32 %v373, %v375
        %v377 = vrot.slane %v369, %v376
        %v379 = vunpack.c.l.s4 1983009808
        %v380 = vunpack.c.0.s8 %v379
        %v381 = vlaneseq
        %v382 = vshrl.u32 %v381, 7
        %v383 = vsub.s32 %v380, %v382
        %v384 = vrot.slane %v370, %v383
        %v385 = vcombine.low %v178, %v200
        %v386 = vcombine.high %v178, %v200
        %v388 = vunpack.c.l.s4 1983009808
        %v389 = vunpack.c.0.s8 %v388
        %v390 = vlaneseq
        %v391 = vshrl.u32 %v390, 7
        %v392 = vsub.s32 %v389, %v391
        %v393 = vrot.slane %v385, %v392
        %v395 = vunpack.c.l.s4 1983009808
        %v396 = vunpack.c.0.s8 %v395
        %v397 = vlaneseq
        %v398 = vshrl.u32 %v397, 7
        %v399 = vsub.s32 %v396, %v398
        %v400 = vrot.slane %v386, %v399
        %v401 = vcombine.low %v345, %v361
        %v402 = vcombine.high %v345, %v361
        %v404 = vunpack.c.l.s4 1934713408
        %v405 = vunpack.c.0.s8 %v404
        %v406 = vlaneseq
        %v407 = vshrl.u32 %v406, 7
        %v408 = vsub.s32 %v405, %v407
        %v409 = vrot.slane %v401, %v408
        %v411 = vunpack.c.l.s4 1934713408
        %v412 = vunpack.c.0.s8 %v411
        %v413 = vlaneseq
        %v414 = vshrl.u32 %v413, 7
        %v415 = vsub.s32 %v412, %v414
        %v416 = vrot.slane %v402, %v415
        %v417 = vcombine.low %v352, %v368
        %v418 = vcombine.high %v352, %v368
        %v420 = vunpack.c.l.s4 1934713408
        %v421 = vunpack.c.0.s8 %v420
        %v422 = vlaneseq
        %v423 = vshrl.u32 %v422, 7
        %v424 = vsub.s32 %v421, %v423
        %v425 = vrot.slane %v417, %v424
        %v427 = vunpack.c.l.s4 1934713408
        %v428 = vunpack.c.0.s8 %v427
        %v429 = vlaneseq
        %v430 = vshrl.u32 %v429, 7
        %v431 = vsub.s32 %v428, %v430
        %v432 = vrot.slane %v418, %v431
        %v433 = vcombine.low %v377, %v393
        %v434 = vcombine.high %v377, %v393
        %v436 = vunpack.c.l.s4 1934713408
        %v437 = vunpack.c.0.s8 %v436
        %v438 = vlaneseq
        %v439 = vshrl.u32 %v438, 7
        %v440 = vsub.s32 %v437, %v439
        %v441 = vrot.slane %v433, %v440
        %v443 = vunpack.c.l.s4 1934713408
        %v444 = vunpack.c.0.s8 %v443
        %v445 = vlaneseq
        %v446 = vshrl.u32 %v445, 7
        %v447 = vsub.s32 %v444, %v446
        %v448 = vrot.slane %v434, %v447
        %v449 = vcombine.low %v384, %v400
        %v450 = vcombine.high %v384, %v400
        %v452 = vunpack.c.l.s4 1934713408
        %v453 = vunpack.c.0.s8 %v452
        %v454 = vlaneseq
        %v455 = vshrl.u32 %v454, 7
        %v456 = vsub.s32 %v453, %v455
        %v457 = vrot.slane %v449, %v456
        %v459 = vunpack.c.l.s4 1934713408
        %v460 = vunpack.c.0.s8 %v459
        %v461 = vlaneseq
        %v462 = vshrl.u32 %v461, 7
        %v463 = vsub.s32 %v460, %v462
        %v464 = vrot.slane %v450, %v463
        %v465 = vcombine.low %v409, %v441
        %v466 = vcombine.high %v409, %v441
        %v467 = vcombine.low %v416, %v448
        %v468 = vcombine.high %v416, %v448
        %v469 = vcombine.low %v425, %v457
        %v470 = vcombine.high %v425, %v457
        %v471 = vcombine.low %v432, %v464
        %v472 = vcombine.high %v432, %v464
        %474 = vrot.lane.b32.xlu0 %v330, 2
        %v475 = vpop.permute.xlu0 %474
        %478 = vrot.lane.b32.xlu0 %v331, 4
        %v479 = vpop.permute.xlu0 %478
        %482 = vrot.lane.b32.xlu0 %v332, 6
        %v483 = vpop.permute.xlu0 %482
        %486 = vrot.lane.b32.xlu0 %v333, 8
        %v487 = vpop.permute.xlu0 %486
        %490 = vrot.lane.b32.xlu0 %v334, 10
        %v491 = vpop.permute.xlu0 %490
        %494 = vrot.lane.b32.xlu0 %v335, 12
        %v495 = vpop.permute.xlu0 %494
        %498 = vrot.lane.b32.xlu0 %v336, 14
        %v499 = vpop.permute.xlu0 %498
        %502 = vrot.lane.b32.xlu0 %v465, 16
        %v503 = vpop.permute.xlu0 %502
        %506 = vrot.lane.b32.xlu0 %v466, 18
        %v507 = vpop.permute.xlu0 %506
        %510 = vrot.lane.b32.xlu0 %v467, 20
        %v511 = vpop.permute.xlu0 %510
        %514 = vrot.lane.b32.xlu0 %v468, 22
        %v515 = vpop.permute.xlu0 %514
        %518 = vrot.lane.b32.xlu0 %v469, 24
        %v519 = vpop.permute.xlu0 %518
        %522 = vrot.lane.b32.xlu0 %v470, 26
        %v523 = vpop.permute.xlu0 %522
        %526 = vrot.lane.b32.xlu0 %v471, 28
        %v527 = vpop.permute.xlu0 %526
        %530 = vrot.lane.b32.xlu0 %v472, 30
        %v531 = vpop.permute.xlu0 %530
        %vm533 = vcmask 15360
        %v534 = vsel %vm533, %v329, %v475
        %vm535 = vcmask 31744
        %v536 = vsel %vm535, %v534, %v479
        %vm537 = vcmask 48128
        %v538 = vsel %vm537, %v536, %v483
        %vm539 = vcmask 64512
        %v540 = vsel %vm539, %v538, %v487
        %vm541 = vcmask 80896
        %v542 = vsel %vm541, %v540, %v491
        %vm543 = vcmask 97280
        %v544 = vsel %vm543, %v542, %v495
        %vm545 = vcmask 113664
        %v546 = vsel %vm545, %v544, %v499
        %vm547 = vcmask 130048
        %v548 = vsel %vm547, %v546, %v503
        %vm549 = vcmask 146432
        %v550 = vsel %vm549, %v548, %v507
        %vm551 = vcmask 162816
        %v552 = vsel %vm551, %v550, %v511
        %vm553 = vcmask 179200
        %v554 = vsel %vm553, %v552, %v515
        %vm555 = vcmask 195584
        %v556 = vsel %vm555, %v554, %v519
        %vm557 = vcmask 211968
        %v558 = vsel %vm557, %v556, %v523
        %vm559 = vcmask 228352
        %v560 = vsel %vm559, %v558, %v527
        %vm561 = vcmask 244736
        %v562 = vsel %vm561, %v560, %v531
        %vm563 = vcmask 261120
        %564 = vst.msk [vmem:[%s107] sm:$0xff] %vm563, %v562
        %566 = vrot.lane.b32.xlu0 %v562, 32
        %v567 = vpop.permute.xlu0 %566
        %vm569 = vcmask 523520
        %570 = vst.msk [vmem:[%s107] sm:$0xff] %vm569, %v567
        %v571 = vld [vmem:[%s111] sm:$0xff]
        %v572 = vlaneseq
        %v573 = vshrl.u32 %v572, 7
        %v574 = vsub.s32 0, %v573
        %v575 = vrot.slane %v571, %v574
        %s577 = sor.u32 256, 16
        %578 = vbcast.lane.b32.xlu0 %v575, %s577
        %v579 = vpop.permute.xlu0 %578
        %s581 = sor.u32 256, 24
        %582 = vbcast.lane.b32.xlu0 %v575, %s581
        %v583 = vpop.permute.xlu0 %582
        %v584 = vlaneseq
        %v585 = vshrl.u32 %v584, 7
        %v586 = vsub.s32 1, %v585
        %v587 = vrot.slane %v571, %v586
        %s589 = sor.u32 256, 16
        %590 = vbcast.lane.b32.xlu0 %v587, %s589
        %v591 = vpop.permute.xlu0 %590
        %s593 = sor.u32 256, 24
        %594 = vbcast.lane.b32.xlu0 %v587, %s593
        %v595 = vpop.permute.xlu0 %594
        %v596 = vlaneseq
        %v597 = vshrl.u32 %v596, 7
        %v598 = vsub.s32 2, %v597
        %v599 = vrot.slane %v571, %v598
        %s601 = sor.u32 256, 16
        %602 = vbcast.lane.b32.xlu0 %v599, %s601
        %v603 = vpop.permute.xlu0 %602
        %s605 = sor.u32 256, 24
        %606 = vbcast.lane.b32.xlu0 %v599, %s605
        %v607 = vpop.permute.xlu0 %606
        %v608 = vlaneseq
        %v609 = vshrl.u32 %v608, 7
        %v610 = vsub.s32 3, %v609
        %v611 = vrot.slane %v571, %v610
        %s613 = sor.u32 256, 16
        %614 = vbcast.lane.b32.xlu0 %v611, %s613
        %v615 = vpop.permute.xlu0 %614
        %s617 = sor.u32 256, 24
        %618 = vbcast.lane.b32.xlu0 %v611, %s617
        %v619 = vpop.permute.xlu0 %618
        %v620 = vlaneseq
        %v621 = vshrl.u32 %v620, 7
        %v622 = vsub.s32 4, %v621
        %v623 = vrot.slane %v571, %v622
        %s625 = sor.u32 256, 16
        %626 = vbcast.lane.b32.xlu0 %v623, %s625
        %v627 = vpop.permute.xlu0 %626
        %s629 = sor.u32 256, 24
        %630 = vbcast.lane.b32.xlu0 %v623, %s629
        %v631 = vpop.permute.xlu0 %630
        %v632 = vlaneseq
        %v633 = vshrl.u32 %v632, 7
        %v634 = vsub.s32 5, %v633
        %v635 = vrot.slane %v571, %v634
        %s637 = sor.u32 256, 16
        %638 = vbcast.lane.b32.xlu0 %v635, %s637
        %v639 = vpop.permute.xlu0 %638
        %s641 = sor.u32 256, 24
        %642 = vbcast.lane.b32.xlu0 %v635, %s641
        %v643 = vpop.permute.xlu0 %642
        %v644 = vlaneseq
        %v645 = vshrl.u32 %v644, 7
        %v646 = vsub.s32 6, %v645
        %v647 = vrot.slane %v571, %v646
        %s649 = sor.u32 256, 16
        %650 = vbcast.lane.b32.xlu0 %v647, %s649
        %v651 = vpop.permute.xlu0 %650
        %s653 = sor.u32 256, 24
        %654 = vbcast.lane.b32.xlu0 %v647, %s653
        %v655 = vpop.permute.xlu0 %654
        %v656 = vlaneseq
        %v657 = vshrl.u32 %v656, 7
        %v658 = vsub.s32 7, %v657
        %v659 = vrot.slane %v571, %v658
        %s661 = sor.u32 256, 16
        %662 = vbcast.lane.b32.xlu0 %v659, %s661
        %v663 = vpop.permute.xlu0 %662
        %s665 = sor.u32 256, 24
        %666 = vbcast.lane.b32.xlu0 %v659, %s665
        %v667 = vpop.permute.xlu0 %666
        %v668 = vcombine.low %v579, %v603
        %v669 = vcombine.high %v579, %v603
        %v671 = vunpack.c.l.s4 1983009808
        %v672 = vunpack.c.0.s8 %v671
        %v673 = vlaneseq
        %v674 = vshrl.u32 %v673, 7
        %v675 = vsub.s32 %v672, %v674
        %v676 = vrot.slane %v668, %v675
        %v678 = vunpack.c.l.s4 1983009808
        %v679 = vunpack.c.0.s8 %v678
        %v680 = vlaneseq
        %v681 = vshrl.u32 %v680, 7
        %v682 = vsub.s32 %v679, %v681
        %v683 = vrot.slane %v669, %v682
        %v684 = vcombine.low %v591, %v615
        %v685 = vcombine.high %v591, %v615
        %v687 = vunpack.c.l.s4 1983009808
        %v688 = vunpack.c.0.s8 %v687
        %v689 = vlaneseq
        %v690 = vshrl.u32 %v689, 7
        %v691 = vsub.s32 %v688, %v690
        %v692 = vrot.slane %v684, %v691
        %v694 = vunpack.c.l.s4 1983009808
        %v695 = vunpack.c.0.s8 %v694
        %v696 = vlaneseq
        %v697 = vshrl.u32 %v696, 7
        %v698 = vsub.s32 %v695, %v697
        %v699 = vrot.slane %v685, %v698
        %v700 = vcombine.low %v627, %v651
        %v701 = vcombine.high %v627, %v651
        %v703 = vunpack.c.l.s4 1983009808
        %v704 = vunpack.c.0.s8 %v703
        %v705 = vlaneseq
        %v706 = vshrl.u32 %v705, 7
        %v707 = vsub.s32 %v704, %v706
        %v708 = vrot.slane %v700, %v707
        %v710 = vunpack.c.l.s4 1983009808
        %v711 = vunpack.c.0.s8 %v710
        %v712 = vlaneseq
        %v713 = vshrl.u32 %v712, 7
        %v714 = vsub.s32 %v711, %v713
        %v715 = vrot.slane %v701, %v714
        %v716 = vcombine.low %v639, %v663
        %v717 = vcombine.high %v639, %v663
        %v719 = vunpack.c.l.s4 1983009808
        %v720 = vunpack.c.0.s8 %v719
        %v721 = vlaneseq
        %v722 = vshrl.u32 %v721, 7
        %v723 = vsub.s32 %v720, %v722
        %v724 = vrot.slane %v716, %v723
        %v726 = vunpack.c.l.s4 1983009808
        %v727 = vunpack.c.0.s8 %v726
        %v728 = vlaneseq
        %v729 = vshrl.u32 %v728, 7
        %v730 = vsub.s32 %v727, %v729
        %v731 = vrot.slane %v717, %v730
        %v732 = vcombine.low %v676, %v692
        %v733 = vcombine.high %v676, %v692
        %v735 = vunpack.c.l.s4 1934713408
        %v736 = vunpack.c.0.s8 %v735
        %v737 = vlaneseq
        %v738 = vshrl.u32 %v737, 7
        %v739 = vsub.s32 %v736, %v738
        %v740 = vrot.slane %v732, %v739
        %v742 = vunpack.c.l.s4 1934713408
        %v743 = vunpack.c.0.s8 %v742
        %v744 = vlaneseq
        %v745 = vshrl.u32 %v744, 7
        %v746 = vsub.s32 %v743, %v745
        %v747 = vrot.slane %v733, %v746
        %v748 = vcombine.low %v683, %v699
        %v749 = vcombine.high %v683, %v699
        %v751 = vunpack.c.l.s4 1934713408
        %v752 = vunpack.c.0.s8 %v751
        %v753 = vlaneseq
        %v754 = vshrl.u32 %v753, 7
        %v755 = vsub.s32 %v752, %v754
        %v756 = vrot.slane %v748, %v755
        %v758 = vunpack.c.l.s4 1934713408
        %v759 = vunpack.c.0.s8 %v758
        %v760 = vlaneseq
        %v761 = vshrl.u32 %v760, 7
        %v762 = vsub.s32 %v759, %v761
        %v763 = vrot.slane %v749, %v762
        %v764 = vcombine.low %v708, %v724
        %v765 = vcombine.high %v708, %v724
        %v767 = vunpack.c.l.s4 1934713408
        %v768 = vunpack.c.0.s8 %v767
        %v769 = vlaneseq
        %v770 = vshrl.u32 %v769, 7
        %v771 = vsub.s32 %v768, %v770
        %v772 = vrot.slane %v764, %v771
        %v774 = vunpack.c.l.s4 1934713408
        %v775 = vunpack.c.0.s8 %v774
        %v776 = vlaneseq
        %v777 = vshrl.u32 %v776, 7
        %v778 = vsub.s32 %v775, %v777
        %v779 = vrot.slane %v765, %v778
        %v780 = vcombine.low %v715, %v731
        %v781 = vcombine.high %v715, %v731
        %v783 = vunpack.c.l.s4 1934713408
        %v784 = vunpack.c.0.s8 %v783
        %v785 = vlaneseq
        %v786 = vshrl.u32 %v785, 7
        %v787 = vsub.s32 %v784, %v786
        %v788 = vrot.slane %v780, %v787
        %v790 = vunpack.c.l.s4 1934713408
        %v791 = vunpack.c.0.s8 %v790
        %v792 = vlaneseq
        %v793 = vshrl.u32 %v792, 7
        %v794 = vsub.s32 %v791, %v793
        %v795 = vrot.slane %v781, %v794
        %v796 = vcombine.low %v740, %v772
        %v797 = vcombine.high %v740, %v772
        %v798 = vcombine.low %v747, %v779
        %v799 = vcombine.high %v747, %v779
        %v800 = vcombine.low %v756, %v788
        %v801 = vcombine.high %v756, %v788
        %v802 = vcombine.low %v763, %v795
        %v803 = vcombine.high %v763, %v795
        %v804 = vcombine.low %v583, %v607
        %v805 = vcombine.high %v583, %v607
        %v807 = vunpack.c.l.s4 1983009808
        %v808 = vunpack.c.0.s8 %v807
        %v809 = vlaneseq
        %v810 = vshrl.u32 %v809, 7
        %v811 = vsub.s32 %v808, %v810
        %v812 = vrot.slane %v804, %v811
        %v814 = vunpack.c.l.s4 1983009808
        %v815 = vunpack.c.0.s8 %v814
        %v816 = vlaneseq
        %v817 = vshrl.u32 %v816, 7
        %v818 = vsub.s32 %v815, %v817
        %v819 = vrot.slane %v805, %v818
        %v820 = vcombine.low %v595, %v619
        %v821 = vcombine.high %v595, %v619
        %v823 = vunpack.c.l.s4 1983009808
        %v824 = vunpack.c.0.s8 %v823
        %v825 = vlaneseq
        %v826 = vshrl.u32 %v825, 7
        %v827 = vsub.s32 %v824, %v826
        %v828 = vrot.slane %v820, %v827
        %v830 = vunpack.c.l.s4 1983009808
        %v831 = vunpack.c.0.s8 %v830
        %v832 = vlaneseq
        %v833 = vshrl.u32 %v832, 7
        %v834 = vsub.s32 %v831, %v833
        %v835 = vrot.slane %v821, %v834
        %v836 = vcombine.low %v631, %v655
        %v837 = vcombine.high %v631, %v655
        %v839 = vunpack.c.l.s4 1983009808
        %v840 = vunpack.c.0.s8 %v839
        %v841 = vlaneseq
        %v842 = vshrl.u32 %v841, 7
        %v843 = vsub.s32 %v840, %v842
        %v844 = vrot.slane %v836, %v843
        %v846 = vunpack.c.l.s4 1983009808
        %v847 = vunpack.c.0.s8 %v846
        %v848 = vlaneseq
        %v849 = vshrl.u32 %v848, 7
        %v850 = vsub.s32 %v847, %v849
        %v851 = vrot.slane %v837, %v850
        %v852 = vcombine.low %v643, %v667
        %v853 = vcombine.high %v643, %v667
        %v855 = vunpack.c.l.s4 1983009808
        %v856 = vunpack.c.0.s8 %v855
        %v857 = vlaneseq
        %v858 = vshrl.u32 %v857, 7
        %v859 = vsub.s32 %v856, %v858
        %v860 = vrot.slane %v852, %v859
        %v862 = vunpack.c.l.s4 1983009808
        %v863 = vunpack.c.0.s8 %v862
        %v864 = vlaneseq
        %v865 = vshrl.u32 %v864, 7
        %v866 = vsub.s32 %v863, %v865
        %v867 = vrot.slane %v853, %v866
        %v868 = vcombine.low %v812, %v828
        %v869 = vcombine.high %v812, %v828
        %v871 = vunpack.c.l.s4 1934713408
        %v872 = vunpack.c.0.s8 %v871
        %v873 = vlaneseq
        %v874 = vshrl.u32 %v873, 7
        %v875 = vsub.s32 %v872, %v874
        %v876 = vrot.slane %v868, %v875
        %v878 = vunpack.c.l.s4 1934713408
        %v879 = vunpack.c.0.s8 %v878
        %v880 = vlaneseq
        %v881 = vshrl.u32 %v880, 7
        %v882 = vsub.s32 %v879, %v881
        %v883 = vrot.slane %v869, %v882
        %v884 = vcombine.low %v819, %v835
        %v885 = vcombine.high %v819, %v835
        %v887 = vunpack.c.l.s4 1934713408
        %v888 = vunpack.c.0.s8 %v887
        %v889 = vlaneseq
        %v890 = vshrl.u32 %v889, 7
        %v891 = vsub.s32 %v888, %v890
        %v892 = vrot.slane %v884, %v891
        %v894 = vunpack.c.l.s4 1934713408
        %v895 = vunpack.c.0.s8 %v894
        %v896 = vlaneseq
        %v897 = vshrl.u32 %v896, 7
        %v898 = vsub.s32 %v895, %v897
        %v899 = vrot.slane %v885, %v898
        %v900 = vcombine.low %v844, %v860
        %v901 = vcombine.high %v844, %v860
        %v903 = vunpack.c.l.s4 1934713408
        %v904 = vunpack.c.0.s8 %v903
        %v905 = vlaneseq
        %v906 = vshrl.u32 %v905, 7
        %v907 = vsub.s32 %v904, %v906
        %v908 = vrot.slane %v900, %v907
        %v910 = vunpack.c.l.s4 1934713408
        %v911 = vunpack.c.0.s8 %v910
        %v912 = vlaneseq
        %v913 = vshrl.u32 %v912, 7
        %v914 = vsub.s32 %v911, %v913
        %v915 = vrot.slane %v901, %v914
        %v916 = vcombine.low %v851, %v867
        %v917 = vcombine.high %v851, %v867
        %v919 = vunpack.c.l.s4 1934713408
        %v920 = vunpack.c.0.s8 %v919
        %v921 = vlaneseq
        %v922 = vshrl.u32 %v921, 7
        %v923 = vsub.s32 %v920, %v922
        %v924 = vrot.slane %v916, %v923
        %v926 = vunpack.c.l.s4 1934713408
        %v927 = vunpack.c.0.s8 %v926
        %v928 = vlaneseq
        %v929 = vshrl.u32 %v928, 7
        %v930 = vsub.s32 %v927, %v929
        %v931 = vrot.slane %v917, %v930
        %v932 = vcombine.low %v876, %v908
        %v933 = vcombine.high %v876, %v908
        %v934 = vcombine.low %v883, %v915
        %v935 = vcombine.high %v883, %v915
        %v936 = vcombine.low %v892, %v924
        %v937 = vcombine.high %v892, %v924
        %v938 = vcombine.low %v899, %v931
        %v939 = vcombine.high %v899, %v931
        %941 = vrot.lane.b32.xlu0 %v797, 2
        %v942 = vpop.permute.xlu0 %941
        %945 = vrot.lane.b32.xlu0 %v798, 4
        %v946 = vpop.permute.xlu0 %945
        %949 = vrot.lane.b32.xlu0 %v799, 6
        %v950 = vpop.permute.xlu0 %949
        %953 = vrot.lane.b32.xlu0 %v800, 8
        %v954 = vpop.permute.xlu0 %953
        %957 = vrot.lane.b32.xlu0 %v801, 10
        %v958 = vpop.permute.xlu0 %957
        %961 = vrot.lane.b32.xlu0 %v802, 12
        %v962 = vpop.permute.xlu0 %961
        %965 = vrot.lane.b32.xlu0 %v803, 14
        %v966 = vpop.permute.xlu0 %965
        %969 = vrot.lane.b32.xlu0 %v932, 16
        %v970 = vpop.permute.xlu0 %969
        %973 = vrot.lane.b32.xlu0 %v933, 18
        %v974 = vpop.permute.xlu0 %973
        %977 = vrot.lane.b32.xlu0 %v934, 20
        %v978 = vpop.permute.xlu0 %977
        %981 = vrot.lane.b32.xlu0 %v935, 22
        %v982 = vpop.permute.xlu0 %981
        %985 = vrot.lane.b32.xlu0 %v936, 24
        %v986 = vpop.permute.xlu0 %985
        %989 = vrot.lane.b32.xlu0 %v937, 26
        %v990 = vpop.permute.xlu0 %989
        %993 = vrot.lane.b32.xlu0 %v938, 28
        %v994 = vpop.permute.xlu0 %993
        %997 = vrot.lane.b32.xlu0 %v939, 30
        %v998 = vpop.permute.xlu0 %997
        %v1000 = vsel %vm533, %v796, %v942
        %v1001 = vsel %vm535, %v1000, %v946
        %v1002 = vsel %vm537, %v1001, %v950
        %v1003 = vsel %vm539, %v1002, %v954
        %v1004 = vsel %vm541, %v1003, %v958
        %v1005 = vsel %vm543, %v1004, %v962
        %v1006 = vsel %vm545, %v1005, %v966
        %v1007 = vsel %vm547, %v1006, %v970
        %v1008 = vsel %vm549, %v1007, %v974
        %v1009 = vsel %vm551, %v1008, %v978
        %v1010 = vsel %vm553, %v1009, %v982
        %v1011 = vsel %vm555, %v1010, %v986
        %v1012 = vsel %vm557, %v1011, %v990
        %v1013 = vsel %vm559, %v1012, %v994
        %v1014 = vsel %vm561, %v1013, %v998
        %1016 = vrot.lane.b32.xlu0 %v1014, 64
        %v1017 = vpop.permute.xlu0 %1016
        %vm1019 = vcmask 785920
        %1020 = vst.msk [vmem:[%s107] sm:$0xff] %vm1019, %v1017
        %1021 = vrot.lane.b32.xlu0 %v1014, 96
        %v1022 = vpop.permute.xlu0 %1021
        %vm1024 = vcmask 1048320
        %1025 = vst.msk [vmem:[%s107] sm:$0xff] %vm1024, %v1022
        %s1026 = sand.u32 %s49, 1
        %s1027 = scalar_lea.sflag [#allocation3], %s1026
        %s1028 = sand.u32 %s49, 1
        %s1029 = smul.addr %s1028, 8
        %s1030 = scalar_lea.vmem [#allocation2], %s1029
        // Predicated region
        $region25: #{tpu_custom_call.1} parent=23 // pred_check
          %p1031 = pneg %p59
        $region26: #{tpu_custom_call.1} parent=23 // pred_check_branch
          %1033 = sbr.rel (%p1031) target = $region28
        $region27: #{tpu_custom_call.1} parent=23 // pred_region
          %s1035 = ssub.s32 128, 128
          %1036 = vsyncadd %s1027, %s1035
          %s1037 = smul.addr %s15, 128
          %s1038 = scalar_lea.hbm %s1, %s1037
          %s1040 = sshll.u32 %s1030, 4
          %s1041 = int_to_ptr.vmem [resolvable:$true] %s1040
          %1043 = dma.vmem_to_hbm [thread:$0]  %s1041, 128, %s1038, %s1027
        $region28: #{tpu_custom_call.1} parent=23 // pred_fallthru
          _
      $region24: #{tpu_custom_call.1} parent=5 // pred_fallthru
        _
      %p1044 = scmp.le.s32.totalorder 2, %s10
      // Predicated region
      $region29: #{tpu_custom_call.1} parent=5 // pred_check
        %p1045 = pneg %p1044
      $region30: #{tpu_custom_call.1} parent=5 // pred_check_branch
        %1047 = sbr.rel (%p1045) target = $region32
      $region31: #{tpu_custom_call.1} parent=5 // pred_region
        %s1048 = ssub.s32 %s10, 2
        // Predicated region
        $region33: #{tpu_custom_call.1} parent=31 // pred_check
          %p1049 = pneg %p65
        $region34: #{tpu_custom_call.1} parent=31 // pred_check_branch
          %1051 = sbr.rel (%p1049) target = $region36
        $region35: #{tpu_custom_call.1} parent=31 // pred_region
          %s1052 = sand.u32 %s50, 1
          %s1053 = scalar_lea.sflag [#allocation3], %s1052
          %s1054 = sand.u32 %s50, 1
          %s1055 = smul.addr %s1054, 8
          %s1056 = scalar_lea.vmem [#allocation2], %s1055
          %1057 = dma.done %s1053, 128
        $region36: #{tpu_custom_call.1} parent=31 // pred_fallthru
          _
      $region32: #{tpu_custom_call.1} parent=5 // pred_fallthru
        _
    $region6: #{tpu_custom_call.1} parent=1 // loop_footer
      %s14 = sadd.s32 1, %s10
    $region7: #{tpu_custom_call.1} parent=1 // loop_footer_branch
      %9 = sbr.rel target = $region3
    $region8: #{tpu_custom_call.1} parent=1 // loop_exit
      _
    %1058 = vsyncpa [#allocation3], 1
    %s1059 = scalar_lea.sflag [#allocation3], 1
    %1060 = vsyncpa %s1059, 1

</llo_original>
